<compile_context>
chip_gen: v5e
topology: v5e:2x2
jax: 0.10.0
libtpu: 0.0.40
codegen_flags: <defaults>
</compile_context>

<pallas_src>
import jax
import jax.numpy as jnp
from jax.experimental import pallas as pl
from jax.experimental.pallas import tpu as pltpu


def _stm_alias_noop_kernel(x_ref, o_ref):
    # o_ref is the same HBM buffer as x_ref (input_output_aliases={0: 0}),
    # so identity requires no data movement.  touch() installs a fake
    # read+write dependency on the aliased output so the (otherwise empty)
    # kernel keeps correct ordering without issuing any DMA.
    del x_ref
    pltpu.touch(o_ref)


def _stm_dma_copy_kernel(x_ref, o_ref, sem):
    # Fallback: single direct HBM->HBM DMA of the whole tensor.
    copy = pltpu.make_async_copy(x_ref, o_ref, sem)
    copy.start()
    copy.wait()


def stm_forward(x):
    """Pallas implementation of STM.forward(x) == x.

    NOTE: the optimal implementation simply returns x; the kernel below is the
    cheapest possible version if a kernel must exist (e.g. as a fusion
    barrier): zero bytes moved inside the kernel, output aliased onto the
    input HBM buffer.
    """
    itemsize = jnp.dtype(x.dtype).itemsize
    try:
        return pl.pallas_call(
            _stm_alias_noop_kernel,
            out_shape=jax.ShapeDtypeStruct(x.shape, x.dtype),
            in_specs=[pl.BlockSpec(memory_space=pl.ANY)],
            out_specs=pl.BlockSpec(memory_space=pl.ANY),
            input_output_aliases={0: 0},
            compiler_params=pltpu.CompilerParams(has_side_effects=True),
            cost_estimate=pl.CostEstimate(
                flops=0, transcendentals=0, bytes_accessed=0),
        )(x)
    except Exception:
        # Next-best structure per the review: one HBM->HBM DMA, no alias, no
        # VMEM staging, no pad/reshape — identical on v5e/v6e/v7x.
        return pl.pallas_call(
            _stm_dma_copy_kernel,
            out_shape=jax.ShapeDtypeStruct(x.shape, x.dtype),
            in_specs=[pl.BlockSpec(memory_space=pl.ANY)],
            out_specs=pl.BlockSpec(memory_space=pl.ANY),
            scratch_shapes=[pltpu.SemaphoreType.DMA],
            cost_estimate=pl.CostEstimate(
                flops=0, transcendentals=0,
                bytes_accessed=2 * x.size * itemsize),
        )(x)


if __name__ == "__main__":
    # STM(dim, win_size, num_heads, ...) declares no parameters, so there is
    # nothing to initialize — the forward pass is a pure identity.
    key = jax.random.PRNGKey(0)

    B, C, H, W = 2, 4, 16, 16  # NCHW, consistent with a windowed-attention input
    x = jax.random.normal(key, (B, C, H, W), dtype=jnp.float32)

    y = jax.block_until_ready(stm_forward(x))
    assert y.shape == x.shape and y.dtype == x.dtype
    assert bool(jnp.all(y == x))

    # Odd, non-128-multiple element count: no pad/slice path exists anymore,
    # arbitrary shapes go through unchanged.
    x2 = jax.random.normal(jax.random.PRNGKey(0), (2, 3, 7, 5), dtype=jnp.bfloat16)
    y2 = jax.block_until_ready(stm_forward(x2))
    assert y2.shape == x2.shape and y2.dtype == x2.dtype
    assert bool(jnp.all(y2 == x2))

    print("KERNEL_OK")
</pallas_src>

<mosaic_0001>
module attributes {stable_mosaic.version = 11 : i64} {
  func.func @_stm_alias_noop_kernel(%arg0: memref<2x4x16x16xf32, #tpu.memory_space<any>>, %arg1: memref<2x4x16x16xf32, #tpu.memory_space<any>>) attributes {dimension_semantics = [], scalar_prefetch = 0 : i64, scratch_operands = 0 : i64, tpu.core_type = #tpu.core_type<tc>} {
    return
  }
}

module attributes {stable_mosaic.version = 11 : i64} {
  func.func @_stm_dma_copy_kernel(%arg0: memref<2x4x16x16xf32, #tpu.memory_space<any>>, %arg1: memref<2x4x16x16xf32, #tpu.memory_space<any>>, %arg2: memref<!tpu.dma_semaphore, #tpu.memory_space<semaphore_mem>>) attributes {dimension_semantics = [], scalar_prefetch = 0 : i64, scratch_operands = 1 : i64, tpu.core_type = #tpu.core_type<tc>} {
    tpu.enqueue_dma source(%arg0 : memref<2x4x16x16xf32, #tpu.memory_space<any>>) target(%arg1 : memref<2x4x16x16xf32, #tpu.memory_space<any>>) target_semaphore(%arg2 : memref<!tpu.dma_semaphore, #tpu.memory_space<semaphore_mem>>)
    tpu.wait_dma2 semaphore(%arg2 : memref<!tpu.dma_semaphore, #tpu.memory_space<semaphore_mem>>) src(%arg0 : memref<2x4x16x16xf32, #tpu.memory_space<any>>) dst(%arg1 : memref<2x4x16x16xf32, #tpu.memory_space<any>>)
    return
  }
}

</mosaic_0001>

<llo_original>
// kernel: tpu_custom_call.1
$region0: #{tpu_custom_call.1}
  #allocation0 [shape = 'u32[]', space=smem, size = 0x4, offset = 0x4, fixed_abs, tag = 'smem constant byte address 0x4 - core index']
  #allocation1 [shape = 'u32[72,128]{1,0:T(1,128)}', space=vmem, size = 0x9000, scoped, tag = 'internal scratch']
  %s0 = inlined_call_operand.hbm [shape: f32[2,4,16,16], index: 0, kind: input, shape index: {}, may-alias: {0,1}]
  %s1 = inlined_call_operand.hbm [shape: f32[2,4,16,16], index: 1, kind: output, shape index: {}, may-alias: {0,1}]
  %s2 = sld [smem:[#allocation0]]
  $region2: #{tpu_custom_call.1} parent=0
    _
  %s4 = ssub.s32 1, %s2
  %s5 = scalar_select 0, %s4, %s2

// kernel: tpu_custom_call.1
$region0: #{tpu_custom_call.1}
  #allocation0 [shape = 'u32[]', space=smem, size = 0x4, offset = 0x4, fixed_abs, tag = 'smem constant byte address 0x4 - core index']
  #allocation1 [shape = 'u32[72,128]{1,0:T(1,128)}', space=vmem, size = 0x9000, scoped, tag = 'internal scratch']
  #allocation2 [shape = 's32[1]{0}', space=sflag, size = 0x4, scoped, tag = 'scratch operand']
  #allocation3 [shape = 's32[]', space=sflag, size = 0x4, offset = 0, fixed_abs, tag = 'sflag constant byte address 0x0 - dummy sync flag']
  #allocation4 [shape = 'u32[0]{0}', space=smem, size = 0, offset = 0, fixed_abs, tag = 'smem constant byte address 0x0 - null']
  %s0 = inlined_call_operand.hbm [shape: f32[2,4,16,16], index: 0, kind: input, shape index: {}]
  %s1 = inlined_call_operand.hbm [shape: f32[2,4,16,16], index: 1, kind: output, shape index: {}]
  %s2 = sld [smem:[#allocation0]]
  $region2: #{tpu_custom_call.1} parent=0
    _
  %s4 = ssub.s32 1, %s2
  %s5 = scalar_select 0, %s4, %s2
  %s7 = sshll.u32 1, 14
  %s8 = sxor.u32 4294967295, %s7
  %s10 = sshll.u32 %s0, 4
  %s11 = int_to_ptr.hbm [resolvable:$true] %s10
  %s12 = sshll.u32 %s1, 4
  %s13 = int_to_ptr.hbm [resolvable:$true] %s12
  %16 = dma.general %s11, 2048, %s13, [#allocation2], [#allocation3], [#allocation4], 0, 0
  %s17 = smul.u32 2, 4
  %s18 = smul.u32 %s17, 16
  %s19 = smul.u32 %s18, 1
  %s20 = sshll.u32 %s19, 4
  %21 = dma.done [#allocation2], %s20
  %22 = vsyncmov [#allocation2]
  %s23 = vpop.sfrf %22
  %p24 = scmp.eq.s32.totalorder %s23, 0
  %p25 = pneg %p24
  %27 = shalt.err (%p25)

</llo_original>
